<compile_context>
chip_gen: v5e
topology: v5e:2x2
jax: 0.10.0
libtpu: 0.0.40
codegen_flags: <defaults>
</compile_context>

<pallas_src>
import numpy as np
import jax
import jax.numpy as jnp
from jax import lax
from jax.experimental import pallas as pl
from jax.experimental.pallas import tpu as pltpu


# ---------------------------------------------------------------------------
# Kernel 1: image normalizer  (x - mean) * inv_std  over a fully-packed slab
#   images folded to (B*V*3, HW): channels sit on the sublane axis so vregs are
#   fully packed; HW (lane axis) is tiled so each block stays a few hundred KB.
# ---------------------------------------------------------------------------
def _normalize_kernel(mean_ref, inv_std_ref, x_ref, o_ref):
    # x_ref: (R, thw) f32 ; mean/inv_std: (R, 1) f32 ; o_ref: (R, thw) out dtype
    o_ref[...] = ((x_ref[...] - mean_ref[...]) * inv_std_ref[...]).astype(o_ref.dtype)


def normalizer(imgs, pixel_mean, pixel_std, *, out_dtype=jnp.bfloat16, thw=2048):
    """Normalizes all view images in one tiled, fully-packed pass.

    imgs: (B, V, 3, H, W) float32.  Returns (B, V, 3, H, W) in `out_dtype`
    (bf16 by default — the dtype the downstream feature extractor consumes).
    """
    B, V, C, H, W = imgs.shape
    assert C == 3
    HW = H * W
    R = B * V * C                                    # rows = (b, v, c) folded
    x = imgs.reshape(R, HW).astype(jnp.float32)

    # per-row (i.e. per-channel) mean / 1/std columns (tiny, built once)
    mean_rows = jnp.tile(pixel_mean.astype(jnp.float32), B * V).reshape(R, 1)
    inv_rows = jnp.tile((1.0 / pixel_std).astype(jnp.float32), B * V).reshape(R, 1)

    thw = max(128, min((thw // 128) * 128, pl.cdiv(HW, 128) * 128))
    n_tiles = pl.cdiv(HW, thw)
    hw_pad = n_tiles * thw - HW
    if hw_pad:
        x = jnp.pad(x, ((0, 0), (0, hw_pad)))

    out = pl.pallas_call(
        _normalize_kernel,
        out_shape=jax.ShapeDtypeStruct((R, n_tiles * thw), out_dtype),
        grid=(n_tiles,),
        in_specs=[
            pl.BlockSpec((R, 1), lambda j: (0, 0)),        # mean (resident)
            pl.BlockSpec((R, 1), lambda j: (0, 0)),        # 1/std (resident)
            pl.BlockSpec((R, thw), lambda j: (0, j)),
        ],
        out_specs=pl.BlockSpec((R, thw), lambda j: (0, j)),
        compiler_params=pltpu.CompilerParams(
            dimension_semantics=("parallel",)),
    )(mean_rows, inv_rows, x)
    if hw_pad:
        out = out[:, :HW]
    return out.reshape(B, V, C, H, W)


# ---------------------------------------------------------------------------
# Kernel 2: FUSED prediction heads + compute_loss partial sums
#   per tile: preds(2, tn) = W(2, C) @ feat(tn, C)^T + b   (MXU, f32)
#   masked BCE-with-logits / log-L1 partial sums accumulated elementwise into a
#   per-shard, lane-dense VMEM-resident output block (finalized outside).
# ---------------------------------------------------------------------------
def _heads_loss_kernel(w_ref, b_ref, feat_ref, tsdf_t_ref, occ_t_ref, mask_ref,
                       preds_ref, part_ref):
    i = pl.program_id(1)

    @pl.when(i == 0)
    def _():
        part_ref[...] = jnp.zeros_like(part_ref)

    # trans-B MXU matmul: (2, C) @ (tn, C)^T -> (2, tn), lane-dense on N.
    p = lax.dot_general(
        w_ref[...], feat_ref[...],
        dimension_numbers=(((1,), (1,)), ((), ())),
        preferred_element_type=jnp.float32) + b_ref[...]
    preds_ref[...] = p                       # row 0 = tsdf, row 1 = occ

    tsdf_p = p[0:1, :]                       # (1, tn)
    x = p[1:2, :]                            # occupancy logits (1, tn)
    m = mask_ref[...]                        # (1, tn) in {0, 1}; 0 on padding
    y = occ_t_ref[...]                       # (1, tn) in {0, 1}
    ym = y * m

    # numerically stable softplus pieces (all f32, VPU/EUP only)
    log1p_term = jnp.log1p(jnp.exp(-jnp.abs(x)))
    sp_neg = jnp.maximum(-x, 0.0) + log1p_term   # softplus(-x) = -log sigmoid(x)
    sp_pos = jnp.maximum(x, 0.0) + log1p_term    # softplus(x)  = -log(1-sigmoid(x))

    def logt(v):                                  # apply_log_transform
        return jnp.sign(v) * jnp.log1p(jnp.abs(v))

    diff = jnp.abs(logt(tsdf_p) - logt(tsdf_t_ref[...]))

    # per-lane partial sums: pure elementwise adds into the resident VMEM block
    # (no XLU reductions, no SMEM read-modify-writes in the tile body).
    part_ref[0:1, :] += m                        # n_all partial
    part_ref[1:2, :] += ym                       # n_p partial
    part_ref[2:3, :] += ym * sp_neg              # positive BCE term (unweighted)
    part_ref[3:4, :] += m * (1.0 - y) * sp_pos   # negative BCE term
    part_ref[4:5, :] += ym * diff                # log-L1 numerator


def heads_and_loss(feat, w, b, tsdf_target, occ_target, mask,
                   *, pos_weight=1.0, tn=8192, num_shards=2,
                   vmem_limit_bytes=None):
    """Fused tsdf_preds[i]/occ_preds[i] Linear heads + ReconNet.compute_loss.

    feat : (N, C) f32 voxel features (SPVCNN output), read in native layout
    w    : (C, 2) head weights, column 0 = tsdf head, column 1 = occ head
    b    : (2,)   head biases
    tsdf_target / occ_target / mask : (N,)
    Returns (tsdf_pred (N,), occ_pred (N,), loss scalar).

    Tiling: tn is the lane tile over N (sweep 8192..32768 in production; cap
    ~32768 at C=96 for v7x's 64 MiB VMEM, raise `vmem_limit_bytes` on
    v5e/v6e's 128 MiB for larger tiles).  `num_shards` adds a leading
    "parallel" grid axis so v7x's two TensorCores each stream half the tiles;
    per-shard partial sums keep that correct (finalized outside the kernel).
    """
    N, C = feat.shape
    tn = max(128, min((tn // 128) * 128, pl.cdiv(N, 128) * 128))
    tiles = pl.cdiv(N, tn)
    num_shards = max(1, min(num_shards, tiles))
    tiles_per_shard = pl.cdiv(tiles, num_shards)
    n_pad = num_shards * tiles_per_shard * tn
    pad = n_pad - N

    # keep feat f32 (tsdf head feeds a log-L1 loss that is precision-sensitive)
    feat_p = feat.astype(jnp.float32)
    if pad:
        feat_p = jnp.pad(feat_p, ((0, pad), (0, 0)))
    w_t = jnp.transpose(w).astype(jnp.float32)        # (2, C), tiny
    b2 = b.reshape(2, 1).astype(jnp.float32)

    def pad1(v):                                      # (N,) -> (1, n_pad)
        v = v.reshape(1, N).astype(jnp.float32)
        return jnp.pad(v, ((0, 0), (0, pad))) if pad else v

    tsdf_t = pad1(tsdf_target)
    occ_t = pad1(occ_target)
    m = pad1(mask)       # padded voxels get mask = 0 -> excluded from all sums

    preds, partials = pl.pallas_call(
        _heads_loss_kernel,
        out_shape=(
            jax.ShapeDtypeStruct((2, n_pad), jnp.float32),           # preds
            jax.ShapeDtypeStruct((num_shards, 8, tn), jnp.float32),  # partials
        ),
        grid=(num_shards, tiles_per_shard),
        in_specs=[
            pl.BlockSpec((2, C), lambda s, i: (0, 0)),        # weights (resident)
            pl.BlockSpec((2, 1), lambda s, i: (0, 0)),        # bias (resident)
            pl.BlockSpec((tn, C), lambda s, i: (s * tiles_per_shard + i, 0)),
            pl.BlockSpec((1, tn), lambda s, i: (0, s * tiles_per_shard + i)),
            pl.BlockSpec((1, tn), lambda s, i: (0, s * tiles_per_shard + i)),
            pl.BlockSpec((1, tn), lambda s, i: (0, s * tiles_per_shard + i)),
        ],
        out_specs=(
            pl.BlockSpec((2, tn), lambda s, i: (0, s * tiles_per_shard + i)),
            pl.BlockSpec((None, 8, tn), lambda s, i: (s, 0, 0)),   # per-shard acc
        ),
        compiler_params=pltpu.CompilerParams(
            dimension_semantics=("parallel", "arbitrary"),
            vmem_limit_bytes=vmem_limit_bytes),
    )(w_t, b2, feat_p, tsdf_t, occ_t, m)

    # Finalize (single cross-lane reduction + global pos-class weight + the
    # divisions) in JAX: a few KB of partials, megacore/v7x safe.
    sums = jnp.sum(partials, axis=(0, 2))             # (8,)
    n_all, n_p = sums[0], sums[1]
    pos_term, neg_term, tsdf_num = sums[2], sums[3], sums[4]
    w_for_1 = (n_all - n_p) / jnp.maximum(n_p, 1.0) * pos_weight
    occ_loss = (w_for_1 * pos_term + neg_term) / jnp.maximum(n_all, 1.0)
    tsdf_loss = tsdf_num / jnp.maximum(n_p, 1.0)
    # torch path returns 0 * tsdf.sum() when there are no positive targets
    loss = jnp.where(n_p > 0.0, occ_loss + tsdf_loss, jnp.float32(0.0))

    tsdf_pred = preds[0, :N]
    occ_pred = preds[1, :N]
    return tsdf_pred, occ_pred, loss


# ---------------------------------------------------------------------------
# Pure-JAX reference of compute_loss (masked form) for cross-checking
# ---------------------------------------------------------------------------
def _loss_ref(tsdf, occ, tsdf_t, occ_t, m, pos_weight):
    n_all = jnp.sum(m)
    n_p = jnp.sum(occ_t * m)
    w1 = (n_all - n_p) / jnp.maximum(n_p, 1.0) * pos_weight
    sp = jax.nn.softplus
    bce = w1 * occ_t * sp(-occ) + (1.0 - occ_t) * sp(occ)
    occ_loss = jnp.sum(bce * m) / jnp.maximum(n_all, 1.0)
    logt = lambda v: jnp.sign(v) * jnp.log1p(jnp.abs(v))
    tsdf_loss = jnp.sum(jnp.abs(logt(tsdf) - logt(tsdf_t)) * occ_t * m) / jnp.maximum(n_p, 1.0)
    return jnp.where(n_p > 0, occ_loss + tsdf_loss, 0.0)


# ---------------------------------------------------------------------------
# Glue: upsample (pure index manipulation, mirrors ReconNet.upsample)
# ---------------------------------------------------------------------------
def upsample(pre_feat, pre_coords, interval, num=8):
    pos_list = [(1,), (2,), (3,), (1, 2), (1, 3), (2, 3), (1, 2, 3)]
    n, c = pre_feat.shape
    up_feat = jnp.broadcast_to(pre_feat[:, None, :], (n, num, c)).reshape(-1, c)
    offsets = np.zeros((num, 4), dtype=np.float32)
    for i, pos in enumerate(pos_list):
        for p in pos:
            offsets[i + 1, p] = 1.0
    up_coords = pre_coords[:, None, :] + jnp.asarray(offsets)[None] * float(interval)
    up_coords = up_coords.reshape(-1, 4)
    return up_feat, up_coords


# ---------------------------------------------------------------------------
# Demo / driver
# ---------------------------------------------------------------------------
if __name__ == "__main__":
    key = jax.random.PRNGKey(0)

    # ---- images: (B, V, 3, H, W), NCHW per view ----
    B, V, H, W = 1, 2, 16, 16
    key, k_img = jax.random.split(key)
    imgs = jax.random.uniform(k_img, (B, V, 3, H, W), jnp.float32) * 255.0

    pixel_mean = jnp.array([125.78, 112.22, 97.13], jnp.float32)
    pixel_std = jnp.array([59.64, 57.92, 55.41], jnp.float32)

    normalized = normalizer(imgs, pixel_mean, pixel_std, thw=128)   # 2 HW tiles
    ref_norm = (imgs - pixel_mean.reshape(1, 1, 3, 1, 1)) / pixel_std.reshape(1, 1, 3, 1, 1)
    assert bool(jnp.allclose(normalized.astype(jnp.float32), ref_norm,
                             rtol=2e-2, atol=2e-2))

    # TODO(synk): self.feature_extraction (MnasMulti), back_project and
    # self.sp_convs (SPVCNN) are external modules not provided; synthetic
    # per-voxel features stand in for their output below.

    channels = [96, 48, 24]      # SPVCNN output widths feeding the heads
    n_scales = 2
    N_VOX = 1024                 # fixed voxel budget per scale

    losses = []
    pre_feat = None
    pre_coords = None
    for i in range(3):
        interval = 2 ** (n_scales - i)
        C = channels[i]

        key, kf, kw_t, kw_o, kt, ko, km, kc = jax.random.split(key, 8)

        # synthetic SPVCNN output features for this scale (native (N, C) f32)
        feat = jax.random.normal(kf, (N_VOX, C), jnp.float32)

        # head parameters: tsdf_preds[i], occ_preds[i] (each nn.Linear(C, 1))
        w = jnp.concatenate(
            [jax.random.normal(kw_t, (C, 1), jnp.float32) * 0.1,
             jax.random.normal(kw_o, (C, 1), jnp.float32) * 0.1], axis=1)
        b = jnp.zeros((2,), jnp.float32)

        # synthetic ground truth + grid_mask (count > 1)
        tsdf_target = jax.random.uniform(kt, (N_VOX,), jnp.float32, -1.0, 1.0)
        occ_target = (jax.random.uniform(ko, (N_VOX,)) > 0.5).astype(jnp.float32)
        grid_mask = (jax.random.uniform(km, (N_VOX,)) > 0.2).astype(jnp.float32)

        tsdf, occ, loss_i = heads_and_loss(
            feat, w, b, tsdf_target, occ_target, grid_mask,
            pos_weight=1.5, tn=256, num_shards=2)   # grid = (2 shards, 2 tiles)
        losses.append(loss_i)

        # cross-check against a pure-JAX f32 reference
        p_ref = jnp.dot(feat, w, preferred_element_type=jnp.float32) + b
        loss_ref = _loss_ref(p_ref[:, 0], p_ref[:, 1], tsdf_target, occ_target,
                             grid_mask, 1.5)
        assert bool(jnp.allclose(tsdf, p_ref[:, 0], rtol=2e-2, atol=2e-2))
        assert bool(jnp.allclose(occ, p_ref[:, 1], rtol=2e-2, atol=2e-2))
        assert bool(jnp.allclose(loss_i, loss_ref, rtol=2e-2, atol=1e-2))

        # occupancy selection (kept as a mask; dynamic gather left as glue)
        occupancy = jnp.logical_and(occ > 0, grid_mask > 0)
        # TODO(synk): `up_coords[occupancy]` / `feat[occupancy]` need dynamic shapes;
        # here we carry the fixed-size set plus the `occupancy` mask instead.
        coords = jnp.concatenate(
            [jnp.zeros((N_VOX, 1), jnp.float32),
             jax.random.randint(kc, (N_VOX, 3), 0, 64).astype(jnp.float32)], axis=1)
        pre_feat = jnp.concatenate([feat, tsdf[:, None], occ[:, None]], axis=1)
        pre_coords = coords

    # demonstrate the upsample path between levels (index glue, as in the module)
    up_feat, up_coords = upsample(pre_feat[:16], pre_coords[:16], interval=2)
    assert up_feat.shape == (16 * 8, channels[2] + 2)
    assert up_coords.shape == (16 * 8, 4)

    total_loss = sum(losses)
    jax.block_until_ready(total_loss)
    jax.block_until_ready(normalized)
    jax.block_until_ready(up_feat)

    assert bool(jnp.isfinite(total_loss))
    print("KERNEL_OK")
</pallas_src>

<mosaic_0001>
module attributes {stable_mosaic.version = 11 : i64} {
  func.func @_normalize_kernel(%arg0: i32, %arg1: memref<6x1xf32, #tpu.memory_space<vmem>>, %arg2: memref<6x1xf32, #tpu.memory_space<vmem>>, %arg3: memref<6x128xf32, #tpu.memory_space<vmem>>, %arg4: memref<6x128xbf16, #tpu.memory_space<vmem>>) attributes {dimension_semantics = [#tpu.dimension_semantics<parallel>], iteration_bounds = array<i64: 2>, scalar_prefetch = 0 : i64, scratch_operands = 0 : i64, tpu.core_type = #tpu.core_type<tc>, window_params = [{pipeline_mode = #tpu.pipeline_mode<synchronous>, transform_indices = @transform_0, window_bounds = array<i64: 6, 1>}, {pipeline_mode = #tpu.pipeline_mode<synchronous>, transform_indices = @transform_1, window_bounds = array<i64: 6, 1>}, {transform_indices = @transform_2, window_bounds = array<i64: 6, 128>}, {transform_indices = @transform_3, window_bounds = array<i64: 6, 128>}]} {
    %c0 = arith.constant 0 : index
    %c0_0 = arith.constant 0 : index
    %0 = vector.load %arg3[%c0, %c0_0] : memref<6x128xf32, #tpu.memory_space<vmem>>, vector<6x128xf32>
    %c0_1 = arith.constant 0 : index
    %c0_2 = arith.constant 0 : index
    %1 = vector.load %arg1[%c0_1, %c0_2] : memref<6x1xf32, #tpu.memory_space<vmem>>, vector<6x1xf32>
    %2 = vector.broadcast %1 : vector<6x1xf32> to vector<6x128xf32>
    %3 = arith.subf %0, %2 : vector<6x128xf32>
    %c0_3 = arith.constant 0 : index
    %c0_4 = arith.constant 0 : index
    %4 = vector.load %arg2[%c0_3, %c0_4] : memref<6x1xf32, #tpu.memory_space<vmem>>, vector<6x1xf32>
    %5 = vector.broadcast %4 : vector<6x1xf32> to vector<6x128xf32>
    %6 = arith.mulf %3, %5 : vector<6x128xf32>
    %7 = arith.truncf %6 : vector<6x128xf32> to vector<6x128xbf16>
    %c0_5 = arith.constant 0 : index
    %c0_6 = arith.constant 0 : index
    %8 = vector.load %arg4[%c0_5, %c0_6] : memref<6x128xbf16, #tpu.memory_space<vmem>>, vector<6x128xbf16>
    tpu.vector_store %arg4[%c0_5, %c0_6], %7 {strides = array<i32>} : memref<6x128xbf16, #tpu.memory_space<vmem>>, vector<6x128xbf16>,
    return
  }
  func.func @transform_0(%arg0: i32) -> (i32, i32) {
    %c0_i32 = arith.constant 0 : i32
    %c0_i32_0 = arith.constant 0 : i32
    %c0_i32_1 = arith.constant 0 : i32
    return %c0_i32, %c0_i32_0 : i32, i32
  }
  func.func @transform_1(%arg0: i32) -> (i32, i32) {
    %c0_i32 = arith.constant 0 : i32
    %c0_i32_0 = arith.constant 0 : i32
    %c0_i32_1 = arith.constant 0 : i32
    return %c0_i32, %c0_i32_0 : i32, i32
  }
  func.func @transform_2(%arg0: i32) -> (i32, i32) {
    %c0_i32 = arith.constant 0 : i32
    %c0_i32_0 = arith.constant 0 : i32
    return %c0_i32, %arg0 : i32, i32
  }
  func.func @transform_3(%arg0: i32) -> (i32, i32) {
    %c0_i32 = arith.constant 0 : i32
    %c0_i32_0 = arith.constant 0 : i32
    return %c0_i32, %arg0 : i32, i32
  }
}

</mosaic_0001>

<llo_original>
// kernel: tpu_custom_call.1
$region0: #{tpu_custom_call.1}
  #allocation0 [shape = 'u32[]', space=smem, size = 0x4, offset = 0x4, fixed_abs, tag = 'smem constant byte address 0x4 - core index']
  #allocation1 [shape = 'u32[72,128]{1,0:T(1,128)}', space=vmem, size = 0x9000, scoped, tag = 'internal scratch']
  %s0 = inlined_call_operand.vmem [shape: f32[6,1], index: 0, kind: input, shape index: {}]
  %s1 = inlined_call_operand.vmem [shape: f32[6,1], index: 1, kind: input, shape index: {}]
  %s2 = inlined_call_operand.vmem [shape: f32[6,256], index: 2, kind: input, shape index: {}]
  %s3 = inlined_call_operand.hbm [shape: bf16[6,256], index: 3, kind: output, shape index: {}]
  %s4 = sld [smem:[#allocation0]]
  $region45: #{tpu_custom_call.1} parent=0
    _
  %s6 = ssub.s32 1, %s4
  %s7 = scalar_select 0, %s6, %s4
  $region1: #{tpu_custom_call.1} parent=0
    #allocation2 [shape = 'u8[4096]{0}', space=vmem, size = 0x1000, scoped, tag = 'output window, operand 0']
    #allocation3 [shape = 's32[2]{0}', space=sflag, size = 0x8, scoped, tag = 'scoped memory for tpu_custom_call.1']
    %8 = vsyncpa [#allocation3], 0
    %s9 = scalar_lea.sflag [#allocation3], 1
    %10 = vsyncpa %s9, 0
    loop: start=0, step=1, limit=4
    $region2: #{tpu_custom_call.1} parent=1 // loop_pre_header
      _
    $region3: #{tpu_custom_call.1} parent=1 // loop_header
      %s12 = sphi 0, %s16
      %p13 = scmp.ge.s32.totalorder %s12, 4
      %s20 = sphi 0, %s20
      %s22 = sphi 0, %s20
      %s23 = sphi 0, %s22
      %s37 = sphi 0, %s23
      %s41 = sphi 0, %s41
      %s43 = sphi 0, %s41
      %s44 = sphi 0, %s43
      %s58 = sphi 0, %s44
      %s64 = sphi 0, %s66
      %s67 = sphi 0, %s64
      %s68 = sphi 0, %s67
      %s84 = sphi 0, %s68
      %s90 = sphi 0, %s92
      %s93 = sphi 0, %s90
      %s94 = sphi 0, %s93
      %s110 = sphi 0, %s94
    $region4: #{tpu_custom_call.1} parent=1 // loop_header_branch
      %15 = sbr.rel (%p13) target = $region8
    $region5: #{tpu_custom_call.1} parent=1 // loop_body
      %s17 = ssub.s32 %s12, 1
      %s18 = ssub.s32 %s12, 2
      %s19 = sadd.s32 %s12, 1
      %s21 = sadd.s32 %s20, 1
      %p24 = scmp.eq.s32.totalorder %s12, 1
      %p25 = scmp.ne.s32.totalorder %s20, %s22
      %p26 = scmp.eq.s32.totalorder %s12, 0
      %p27 = por %p25, %p26
      %p28 = scmp.ne.s32.totalorder %s20, %s22
      %p29 = scmp.eq.s32.totalorder %s17, 1
      %p30 = por %p28, %p29
      %p31 = scmp.ne.s32.totalorder %s22, %s23
      %p32 = scmp.eq.s32.totalorder %s17, 0
      %p33 = por %p31, %p32
      %p34 = scmp.ne.s32.totalorder %s22, %s23
      %p35 = scmp.eq.s32.totalorder %s18, 1
      %p36 = por %p34, %p35
      %p38 = scmp.ne.s32.totalorder %s23, %s37
      %p39 = scmp.eq.s32.totalorder %s18, 0
      %p40 = por %p38, %p39
      %s42 = sadd.s32 %s41, 1
      %p45 = scmp.eq.s32.totalorder %s12, 1
      %p46 = scmp.ne.s32.totalorder %s41, %s43
      %p47 = scmp.eq.s32.totalorder %s12, 0
      %p48 = por %p46, %p47
      %p49 = scmp.ne.s32.totalorder %s41, %s43
      %p50 = scmp.eq.s32.totalorder %s17, 1
      %p51 = por %p49, %p50
      %p52 = scmp.ne.s32.totalorder %s43, %s44
      %p53 = scmp.eq.s32.totalorder %s17, 0
      %p54 = por %p52, %p53
      %p55 = scmp.ne.s32.totalorder %s43, %s44
      %p56 = scmp.eq.s32.totalorder %s18, 1
      %p57 = por %p55, %p56
      %p59 = scmp.ne.s32.totalorder %s44, %s58
      %p60 = scmp.eq.s32.totalorder %s18, 0
      %p61 = por %p59, %p60
      %s62 = ssub.s32 %s12, %s19
      %p63 = scmp.eq.s32.totalorder %s62, 0
      %s65 = sadd.s32 %s64, 1
      %s66 = scalar_select %p63, %s64, %s65
      %p69 = pneg %p63
      %p70 = scmp.eq.s32.totalorder %s12, 1
      %p71 = por %p69, %p70
      %p72 = scmp.ne.s32.totalorder %s64, %s67
      %p73 = scmp.eq.s32.totalorder %s12, 0
      %p74 = por %p72, %p73
      %p75 = scmp.ne.s32.totalorder %s64, %s67
      %p76 = scmp.eq.s32.totalorder %s17, 1
      %p77 = por %p75, %p76
      %p78 = scmp.ne.s32.totalorder %s67, %s68
      %p79 = scmp.eq.s32.totalorder %s17, 0
      %p80 = por %p78, %p79
      %p81 = scmp.ne.s32.totalorder %s67, %s68
      %p82 = scmp.eq.s32.totalorder %s18, 1
      %p83 = por %p81, %p82
      %p85 = scmp.ne.s32.totalorder %s68, %s84
      %p86 = scmp.eq.s32.totalorder %s18, 0
      %p87 = por %p85, %p86
      %s88 = ssub.s32 %s12, %s19
      %p89 = scmp.eq.s32.totalorder %s88, 0
      %s91 = sadd.s32 %s90, 1
      %s92 = scalar_select %p89, %s90, %s91
      %p95 = pneg %p89
      %p96 = scmp.eq.s32.totalorder %s12, 1
      %p97 = por %p95, %p96
      %p98 = scmp.ne.s32.totalorder %s90, %s93
      %p99 = scmp.eq.s32.totalorder %s12, 0
      %p100 = por %p98, %p99
      %p101 = scmp.ne.s32.totalorder %s90, %s93
      %p102 = scmp.eq.s32.totalorder %s17, 1
      %p103 = por %p101, %p102
      %p104 = scmp.ne.s32.totalorder %s93, %s94
      %p105 = scmp.eq.s32.totalorder %s17, 0
      %p106 = por %p104, %p105
      %p107 = scmp.ne.s32.totalorder %s93, %s94
      %p108 = scmp.eq.s32.totalorder %s18, 1
      %p109 = por %p107, %p108
      %p111 = scmp.ne.s32.totalorder %s94, %s110
      %p112 = scmp.eq.s32.totalorder %s18, 0
      %p113 = por %p111, %p112
      %p114 = scmp.le.s32.totalorder 1, %s12
      %p115 = scmp.lt.s32.totalorder %s12, 3
      %p116 = pnand %p114, %p115
      %p117 = pneg %p116
      // Predicated region
      $region9: #{tpu_custom_call.1} parent=5 // pred_check
        _
      $region10: #{tpu_custom_call.1} parent=5 // pred_check_branch
        %119 = sbr.rel (%p116) target = $region12
      $region11: #{tpu_custom_call.1} parent=5 // pred_region
        %s120 = ssub.s32 %s12, 1
        // Predicated region
        $region13: #{tpu_custom_call.1} parent=11 // pred_check
          %p121 = pneg %p33
        $region14: #{tpu_custom_call.1} parent=11 // pred_check_branch
          %123 = sbr.rel (%p121) target = $region16
        $region15: #{tpu_custom_call.1} parent=11 // pred_region
          _
        $region16: #{tpu_custom_call.1} parent=11 // pred_fallthru
          _
        // Predicated region
        $region17: #{tpu_custom_call.1} parent=11 // pred_check
          %p124 = pneg %p54
        $region18: #{tpu_custom_call.1} parent=11 // pred_check_branch
          %126 = sbr.rel (%p124) target = $region20
        $region19: #{tpu_custom_call.1} parent=11 // pred_region
          _
        $region20: #{tpu_custom_call.1} parent=11 // pred_fallthru
          _
      $region12: #{tpu_custom_call.1} parent=5 // pred_fallthru
        _
      %p127 = scmp.lt.s32.totalorder %s12, 2
      // Predicated region
      $region21: #{tpu_custom_call.1} parent=5 // pred_check
        %p128 = pneg %p127
      $region22: #{tpu_custom_call.1} parent=5 // pred_check_branch
        %130 = sbr.rel (%p128) target = $region24
      $region23: #{tpu_custom_call.1} parent=5 // pred_region
        // Predicated region
        $region25: #{tpu_custom_call.1} parent=23 // pred_check
          %p131 = pneg %p74
        $region26: #{tpu_custom_call.1} parent=23 // pred_check_branch
          %133 = sbr.rel (%p131) target = $region28
        $region27: #{tpu_custom_call.1} parent=23 // pred_region
          %p134 = scmp.lt.s32.totalorder %s12, 1
          %s135 = scalar_select %p134, %s12, 1
          %s136 = smul.addr %s135, 8
          %s137 = scalar_lea.vmem %s2, %s136
        $region28: #{tpu_custom_call.1} parent=23 // pred_fallthru
          _
      $region24: #{tpu_custom_call.1} parent=5 // pred_fallthru
        _
      %p138 = scmp.le.s32.totalorder 1, %s12
      %p139 = scmp.lt.s32.totalorder %s12, 3
      %p140 = pnand %p138, %p139
      %p141 = pneg %p140
      // Predicated region
      $region29: #{tpu_custom_call.1} parent=5 // pred_check
        _
      $region30: #{tpu_custom_call.1} parent=5 // pred_check_branch
        %143 = sbr.rel (%p140) target = $region32
      $region31: #{tpu_custom_call.1} parent=5 // pred_region
        %s144 = ssub.s32 %s12, 1
        %p145 = pneg %p33
        %p146 = pneg %p30
        %p147 = pneg %p54
        %p148 = pneg %p51
        %p149 = scmp.lt.s32.totalorder %s17, 1
        %s150 = scalar_select %p149, %s17, 1
        %s151 = smul.addr %s150, 8
        %s152 = scalar_lea.vmem %s2, %s151
        %p153 = pneg %p80
        %p154 = pneg %p77
        %p155 = pneg %p106
        %p156 = pneg %p103
        %s157 = sand.u32 %s93, 1
        %s158 = scalar_lea.sflag [#allocation3], %s157
        %s159 = sand.u32 %s93, 1
        %s160 = smul.addr %s159, 4
        %s161 = scalar_lea.vmem [#allocation2], %s160
        %p162 = scmp.lt.s32.totalorder %s17, 1
        %s163 = scalar_select %p162, %s17, 1
        %s164 = smul.addr %s163, 8
        %s165 = scalar_lea.vmem %s2, %s164
        %v166 = vld [vmem:[%s165] sm:$0x3f]
        %v167 = vld [vmem:[%s0] sm:$0x3f]
        %169 = vset.pattern.permute.xlu0 0
        %170 = vperm.xlu0 %169, %v167
        %v171 = vpop.permute.xlu0 %170
        %v173 = vsub.f32 %v166, %v171
        %v174 = vld [vmem:[%s1] sm:$0x3f]
        %176 = vset.pattern.permute.xlu0 0
        %177 = vperm.xlu0 %176, %v174
        %v178 = vpop.permute.xlu0 %177
        %v180 = vmul.f32 %v173, %v178
        %v181 = vpack.c.bf16 %v180, %v180
        %182 = vst [vmem:[%s161] sm:$0x7] %v181
        %s183 = sand.u32 %s93, 1
        %s184 = scalar_lea.sflag [#allocation3], %s183
        %s185 = sand.u32 %s93, 1
        %s186 = smul.addr %s185, 4
        %s187 = scalar_lea.vmem [#allocation2], %s186
        // Predicated region
        $region33: #{tpu_custom_call.1} parent=31 // pred_check
          %p188 = pneg %p103
        $region34: #{tpu_custom_call.1} parent=31 // pred_check_branch
          %190 = sbr.rel (%p188) target = $region36
        $region35: #{tpu_custom_call.1} parent=31 // pred_region
          %192 = vsyncadd %s184, 0
          %s193 = smul.addr %s17, 4
          %s194 = scalar_lea.hbm %s3, %s193
          %s196 = sshll.u32 %s187, 4
          %s197 = int_to_ptr.vmem [resolvable:$true] %s196
          %s198 = sshll.u32 %s194, 4
          %s199 = int_to_ptr.hbm [resolvable:$true] %s198
          %201 = dma.vmem_to_hbm [thread:$0]  %s197, 64, %s199, %s184
        $region36: #{tpu_custom_call.1} parent=31 // pred_fallthru
          _
      $region32: #{tpu_custom_call.1} parent=5 // pred_fallthru
        _
      %p202 = scmp.le.s32.totalorder 2, %s12
      // Predicated region
      $region37: #{tpu_custom_call.1} parent=5 // pred_check
        %p203 = pneg %p202
      $region38: #{tpu_custom_call.1} parent=5 // pred_check_branch
        %205 = sbr.rel (%p203) target = $region40
      $region39: #{tpu_custom_call.1} parent=5 // pred_region
        %s206 = ssub.s32 %s12, 2
        // Predicated region
        $region41: #{tpu_custom_call.1} parent=39 // pred_check
          %p207 = pneg %p109
        $region42: #{tpu_custom_call.1} parent=39 // pred_check_branch
          %209 = sbr.rel (%p207) target = $region44
        $region43: #{tpu_custom_call.1} parent=39 // pred_region
          %s210 = sand.u32 %s94, 1
          %s211 = scalar_lea.sflag [#allocation3], %s210
          %s212 = sand.u32 %s94, 1
          %s213 = smul.addr %s212, 4
          %s214 = scalar_lea.vmem [#allocation2], %s213
          %216 = dma.done %s211, 64
        $region44: #{tpu_custom_call.1} parent=39 // pred_fallthru
          _
      $region40: #{tpu_custom_call.1} parent=5 // pred_fallthru
        _
    $region6: #{tpu_custom_call.1} parent=1 // loop_footer
      %s16 = sadd.s32 1, %s12
    $region7: #{tpu_custom_call.1} parent=1 // loop_footer_branch
      %11 = sbr.rel target = $region3
    $region8: #{tpu_custom_call.1} parent=1 // loop_exit
      _
    %217 = vsyncpa [#allocation3], 1
    %s218 = scalar_lea.sflag [#allocation3], 1
    %219 = vsyncpa %s218, 1

</llo_original>
